<compile_context>
chip_gen: v6e
topology: v6e:2x2x1
jax: 0.10.0
libtpu: 0.0.40
codegen_flags: <defaults>
</compile_context>

<pallas_src>
import functools

import jax
import jax.numpy as jnp
from jax.experimental import pallas as pl
from jax.experimental.pallas import tpu as pltpu


def _lsce_kernel(preds_ref, tgt_ref, out_ref, *, one_minus_eps, eps_over_c):
    # preds_ref: (tm, C) input dtype; tgt_ref: (tm, 1) int32; out_ref: (tm, 1) f32
    x = preds_ref[...].astype(jnp.float32)                       # (tm, C)
    m = jnp.max(x, axis=-1, keepdims=True)                       # (tm, 1)
    shifted = x - m
    lse = jnp.log(jnp.sum(jnp.exp(shifted), axis=-1, keepdims=True))   # (tm, 1)
    row_sum = jnp.sum(shifted, axis=-1, keepdims=True)                 # (tm, 1)

    # Pick shifted[i, target[i]] via iota compare (no gather on TPU).
    cls = jax.lax.broadcasted_iota(jnp.int32, shifted.shape, 1)        # (tm, C)
    picked = jnp.sum(jnp.where(cls == tgt_ref[...], shifted, 0.0),
                     axis=-1, keepdims=True)                           # (tm, 1)

    # per-row loss = (1-eps)*(lse - shifted[t]) + (eps/C)*(C*lse - sum shifted)
    #              = lse - (1-eps)*shifted[t] - (eps/C)*sum(shifted)
    out_ref[...] = lse - one_minus_eps * picked - eps_over_c * row_sum


def _pick_row_tile(n, c):
    """Pick a row tile: ~2 MiB of f32 per preds tile, capped at 512 rows.

    2 MiB/tile keeps (double-buffered inputs + elementwise intermediates)
    comfortably inside default scoped VMEM on v5e (16 MiB) as well as
    v6e/v7x (32 MiB)."""
    budget_bytes = 2 * 1024 * 1024
    tm = budget_bytes // (c * 4)
    tm = max(16, min(512, tm))
    tm = (tm // 16) * 16                 # multiple of 16: ok for f32 and bf16 packing
    n16 = -(-n // 16) * 16               # no need to exceed the (rounded) batch
    return min(tm, n16)


def label_smoothing_cross_entropy(preds, target, *, epsilon=0.1,
                                  reduction="mean", tm=None):
    """preds: (N, C) float (f32 or bf16), target: (N,) int. Matches
    torch LabelSmoothingCrossEntropy.forward for reduction in {mean, sum, none}."""
    n, c = preds.shape
    if tm is None:
        tm = _pick_row_tile(n, c)
    tgt2d = target.astype(jnp.int32).reshape(n, 1)

    # Pad the batch to a multiple of tm (padded rows are discarded below).
    n_pad = -(-n // tm) * tm
    if n_pad != n:
        preds = jnp.pad(preds, ((0, n_pad - n), (0, 0)))
        tgt2d = jnp.pad(tgt2d, ((0, n_pad - n), (0, 0)))

    kernel = functools.partial(
        _lsce_kernel,
        one_minus_eps=float(1.0 - epsilon),
        eps_over_c=float(epsilon) / float(c),
    )

    per_row = pl.pallas_call(
        kernel,
        out_shape=jax.ShapeDtypeStruct((n_pad, 1), jnp.float32),
        grid_spec=pltpu.PrefetchScalarGridSpec(
            num_scalar_prefetch=0,
            grid=(n_pad // tm,),
            in_specs=[
                pl.BlockSpec((tm, c), lambda i: (i, 0)),
                pl.BlockSpec((tm, 1), lambda i: (i, 0)),
            ],
            out_specs=pl.BlockSpec((tm, 1), lambda i: (i, 0)),
        ),
        compiler_params=pltpu.CompilerParams(
            # Each grid step writes its own output block -> safe to shard
            # across TensorCores (helps v7x; no-op on v5e/v6e).
            dimension_semantics=("parallel",),
            vmem_limit_bytes=32 * 1024 * 1024,
        ),
    )(preds, tgt2d)

    per_row = per_row[:n, 0]
    if reduction == "mean":
        return jnp.mean(per_row)
    if reduction == "sum":
        return jnp.sum(per_row)
    return per_row


def _reference(preds, target, epsilon=0.1):
    logp = jax.nn.log_softmax(preds.astype(jnp.float32), axis=-1)
    c = preds.shape[-1]
    loss = jnp.mean(-jnp.sum(logp, axis=-1))
    nll = jnp.mean(-jnp.take_along_axis(logp, target[:, None], axis=-1)[:, 0])
    return (1.0 - epsilon) * nll + epsilon * (loss / c)


if __name__ == "__main__":
    key = jax.random.PRNGKey(0)
    k1, k2 = jax.random.split(key)
    N, C = 16, 128
    preds = jax.random.normal(k1, (N, C), dtype=jnp.float32)
    target = jax.random.randint(k2, (N,), 0, C, dtype=jnp.int32)

    out = label_smoothing_cross_entropy(preds, target, epsilon=0.1)
    out = jax.block_until_ready(out)

    ref = _reference(preds, target, epsilon=0.1)
    assert jnp.allclose(out, ref, rtol=1e-5, atol=1e-5), (out, ref)
    print("KERNEL_OK")
</pallas_src>

<mosaic_0001>
module attributes {stable_mosaic.version = 11 : i64} {
  func.func @_lsce_kernel(%arg0: i32, %arg1: memref<16x128xf32, #tpu.memory_space<vmem>>, %arg2: memref<16x1xi32, #tpu.memory_space<vmem>>, %arg3: memref<16x1xf32, #tpu.memory_space<vmem>>) attributes {dimension_semantics = [#tpu.dimension_semantics<parallel>], iteration_bounds = array<i64: 1>, scalar_prefetch = 0 : i64, scratch_operands = 0 : i64, tpu.core_type = #tpu.core_type<tc>, window_params = [{transform_indices = @transform_0, window_bounds = array<i64: 16, 128>}, {transform_indices = @transform_1, window_bounds = array<i64: 16, 1>}, {transform_indices = @transform_2, window_bounds = array<i64: 16, 1>}]} {
    %c0 = arith.constant 0 : index
    %c0_0 = arith.constant 0 : index
    %0 = vector.load %arg1[%c0, %c0_0] : memref<16x128xf32, #tpu.memory_space<vmem>>, vector<16x128xf32>
    %cst = arith.constant dense<0xFF800000> : vector<16xf32>
    %1 = vector.multi_reduction <maximumf>, %0, %cst [1] : vector<16x128xf32> to vector<16xf32>
    %2 = vector.shape_cast %1 : vector<16xf32> to vector<16x1xf32>
    %3 = vector.broadcast %2 : vector<16x1xf32> to vector<16x128xf32>
    %4 = arith.subf %0, %3 : vector<16x128xf32>
    %5 = math.exp %4 : vector<16x128xf32>
    %cst_1 = arith.constant dense<0.000000e+00> : vector<16xf32>
    %6 = vector.multi_reduction <add>, %5, %cst_1 [1] : vector<16x128xf32> to vector<16xf32>
    %7 = vector.shape_cast %6 : vector<16xf32> to vector<16x1xf32>
    %8 = math.log %7 : vector<16x1xf32>
    %cst_2 = arith.constant dense<0.000000e+00> : vector<16xf32>
    %9 = vector.multi_reduction <add>, %4, %cst_2 [1] : vector<16x128xf32> to vector<16xf32>
    %10 = vector.shape_cast %9 : vector<16xf32> to vector<16x1xf32>
    %11 = tpu.iota {dimensions = array<i32: 1>} : vector<16x128xi32>
    %c0_3 = arith.constant 0 : index
    %c0_4 = arith.constant 0 : index
    %12 = vector.load %arg2[%c0_3, %c0_4] : memref<16x1xi32, #tpu.memory_space<vmem>>, vector<16x1xi32>
    %13 = vector.broadcast %12 : vector<16x1xi32> to vector<16x128xi32>
    %14 = arith.cmpi eq, %11, %13 : vector<16x128xi32>
    %cst_5 = arith.constant 0.000000e+00 : f32
    %15 = vector.broadcast %cst_5 : f32 to vector<16x128xf32>
    %16 = arith.select %14, %4, %15 : vector<16x128xi1>, vector<16x128xf32>
    %cst_6 = arith.constant dense<0.000000e+00> : vector<16xf32>
    %17 = vector.multi_reduction <add>, %16, %cst_6 [1] : vector<16x128xf32> to vector<16xf32>
    %18 = vector.shape_cast %17 : vector<16xf32> to vector<16x1xf32>
    %cst_7 = arith.constant 0.899999976 : f32
    %19 = vector.broadcast %cst_7 : f32 to vector<16x1xf32>
    %20 = arith.mulf %19, %18 : vector<16x1xf32>
    %21 = arith.subf %8, %20 : vector<16x1xf32>
    %cst_8 = arith.constant 7.812500e-04 : f32
    %22 = vector.broadcast %cst_8 : f32 to vector<16x1xf32>
    %23 = arith.mulf %22, %10 : vector<16x1xf32>
    %24 = arith.subf %21, %23 : vector<16x1xf32>
    %c0_9 = arith.constant 0 : index
    %c0_10 = arith.constant 0 : index
    %25 = vector.load %arg3[%c0_9, %c0_10] : memref<16x1xf32, #tpu.memory_space<vmem>>, vector<16x1xf32>
    tpu.vector_store %arg3[%c0_9, %c0_10], %24 {strides = array<i32>} : memref<16x1xf32, #tpu.memory_space<vmem>>, vector<16x1xf32>,
    return
  }
  func.func @transform_0(%arg0: i32) -> (i32, i32) {
    %c0_i32 = arith.constant 0 : i32
    %c0_i32_0 = arith.constant 0 : i32
    return %arg0, %c0_i32 : i32, i32
  }
  func.func @transform_1(%arg0: i32) -> (i32, i32) {
    %c0_i32 = arith.constant 0 : i32
    %c0_i32_0 = arith.constant 0 : i32
    return %arg0, %c0_i32 : i32, i32
  }
  func.func @transform_2(%arg0: i32) -> (i32, i32) {
    %c0_i32 = arith.constant 0 : i32
    %c0_i32_0 = arith.constant 0 : i32
    return %arg0, %c0_i32 : i32, i32
  }
}

</mosaic_0001>

<llo_original>
// kernel: tpu_custom_call.1
$region0: #{tpu_custom_call.1}
  #allocation0 [shape = 'u32[]', space=smem, size = 0x4, offset = 0x4, fixed_abs, tag = 'smem constant byte address 0x4 - core index']
  #allocation1 [shape = 'u32[144,128]{1,0:T(1,128)}', space=vmem, size = 0x12000, scoped, tag = 'internal scratch']
  %s0 = inlined_call_operand.vmem [shape: f32[16,128], index: 0, kind: input, shape index: {}]
  %s1 = inlined_call_operand.vmem [shape: s32[16,1], index: 1, kind: input, shape index: {}]
  %s2 = inlined_call_operand.vmem [shape: f32[16,1], index: 2, kind: output, shape index: {}]
  %s3 = sld [smem:[#allocation0]]
  $region18: #{tpu_custom_call.1} parent=0
    _
  %s5 = ssub.s32 1, %s3
  %s6 = scalar_select 0, %s5, %s3
  // Predicated region
  $region2: #{tpu_custom_call.1} parent=0 // pred_check
    _
  $region3: #{tpu_custom_call.1} parent=0 // pred_check_branch
    %8 = sbr.rel (0) target = $region5
  $region4: #{tpu_custom_call.1} parent=0 // pred_region
    _
  $region5: #{tpu_custom_call.1} parent=0 // pred_fallthru
    _
  // Predicated region
  $region6: #{tpu_custom_call.1} parent=0 // pred_check
    _
  $region7: #{tpu_custom_call.1} parent=0 // pred_check_branch
    %10 = sbr.rel (0) target = $region9
  $region8: #{tpu_custom_call.1} parent=0 // pred_region
    _
  $region9: #{tpu_custom_call.1} parent=0 // pred_fallthru
    _
  %v11 = vld [vmem:[%s0] sm:$0xff]
  %v12 = vld [vmem:[%s0 + $0x8] sm:$0xff]
  %13 = vmax.xlane.f32.xlu0 %v11
  %v14 = vpop.xlane.xlu0 %13
  %15 = vmax.xlane.f32.xlu0 %v12
  %v16 = vpop.xlane.xlu0 %15
  %v17 = vsub.f32 %v11, %v14
  %v18 = vsub.f32 %v12, %v16
  %v19 = vmul.f32 %v17, 1.442695
  %v20 = vpow.pop %v19
  %v21 = vmul.f32 %v18, 1.442695
  %v22 = vpow.pop %v21
  %23 = vadd.xlane.f32.xlu0 %v20
  %v24 = vpop.xlane.xlu0 %23
  %25 = vadd.xlane.f32.xlu0 %v22
  %v26 = vpop.xlane.xlu0 %25
  %v27 = vlog2.pop %v24
  %v28 = vmul.f32 %v27, 0.6931472
  %v29 = vlog2.pop %v26
  %v30 = vmul.f32 %v29, 0.6931472
  %31 = vadd.xlane.f32.xlu0 %v17
  %v32 = vpop.xlane.xlu0 %31
  %33 = vadd.xlane.f32.xlu0 %v18
  %v34 = vpop.xlane.xlu0 %33
  %v35 = vlaneseq
  %v36 = vand.u32 %v35, 127
  %v37 = vld [vmem:[%s1] sm:$0xff]
  %v38 = vld [vmem:[%s1 + $0x8] sm:$0xff]
  %39 = vset.pattern.permute.xlu0 0
  %40 = vperm.xlu0 %39, %v37
  %v41 = vpop.permute.xlu0 %40
  %42 = vset.pattern.permute.xlu0 0
  %43 = vperm.xlu0 %42, %v38
  %v44 = vpop.permute.xlu0 %43
  %vm45 = vcmp.eq.s32.totalorder %v36, %v41
  %vm46 = vcmp.eq.s32.totalorder %v36, %v44
  %v47 = vsel %vm45, %v17, 0.0
  %v48 = vsel %vm46, %v18, 0.0
  %49 = vadd.xlane.f32.xlu0 %v47
  %v50 = vpop.xlane.xlu0 %49
  %51 = vadd.xlane.f32.xlu0 %v48
  %v52 = vpop.xlane.xlu0 %51
  %v53 = vmul.f32 %v50, 0.9
  %v54 = vmul.f32 %v52, 0.9
  %v55 = vsub.f32 %v28, %v53
  %v56 = vsub.f32 %v30, %v54
  %v57 = vmul.f32 %v32, 0.00078125
  %v58 = vmul.f32 %v34, 0.00078125
  %v59 = vsub.f32 %v55, %v57
  %v60 = vsub.f32 %v56, %v58
  %vm61 = vcmask 7168
  %62 = vst.msk [vmem:[%s2] sm:$0xff] %vm61, %v59
  %63 = vst.msk [vmem:[%s2 + $0x8] sm:$0xff] %vm61, %v60
  // Predicated region
  $region10: #{tpu_custom_call.1} parent=0 // pred_check
    _
  $region11: #{tpu_custom_call.1} parent=0 // pred_check_branch
    %65 = sbr.rel (0) target = $region13
  $region12: #{tpu_custom_call.1} parent=0 // pred_region
    _
  $region13: #{tpu_custom_call.1} parent=0 // pred_fallthru
    _
  // Predicated region
  $region14: #{tpu_custom_call.1} parent=0 // pred_check
    _
  $region15: #{tpu_custom_call.1} parent=0 // pred_check_branch
    %67 = sbr.rel (0) target = $region17
  $region16: #{tpu_custom_call.1} parent=0 // pred_region
    _
  $region17: #{tpu_custom_call.1} parent=0 // pred_fallthru
    _

</llo_original>
